<compile_context>
chip_gen: v7x
topology: tpu7x:2x2x1
jax: 0.10.0
libtpu: 0.0.40
codegen_flags: <defaults>
</compile_context>

<pallas_src>
import functools

import jax
import jax.numpy as jnp
from jax.experimental import pallas as pl
from jax.experimental.pallas import tpu as pltpu


def _conv_kernel(xf_ref, w_ref, o_ref, p_scr, *, W):
    # xf_ref: (B, Cin, HW + 2*W + 2)  flat input, zero-padded by W+1 on each
    #         side of the row-major H*W lane axis:
    #         xf[b, c, W+1 + i*W + j] = x[b, c, i, j], everything else 0.
    # w_ref:  (Cout, 9*Cin + 1)       tap-major / cin-minor weights, last col = bias.
    # o_ref:  (B, Cout, HW)           lane-dense output slab.
    # p_scr:  (9*Cin + 1, B*HW)       VMEM scratch im2col patch matrix.
    B, Cin, _ = xf_ref.shape
    _, Cout, HW = o_ref.shape
    K = w_ref.shape[1]

    # Column index of each output pixel (lane).  Only the horizontal taps need
    # a mask; vertically out-of-range taps already read the zero padding.
    col = jax.lax.broadcasted_iota(jnp.int32, (1, HW), 1) % W
    ok_left = col != 0           # tap dw = -1 is invalid in column 0
    ok_right = col != (W - 1)    # tap dw = +1 is invalid in column W-1

    # Folded-bias row: constant ones.
    p_scr[K - 1:K, :] = jnp.ones((1, B * HW), jnp.float32)

    # In-kernel im2col: for tap (kh, kw) the flat-index shift is kh*W + kw.
    for b in range(B):
        for kh in range(3):
            for kw in range(3):
                t = kh * 3 + kw
                off = kh * W + kw
                tap = xf_ref[b, :, off:off + HW]          # (Cin, HW) static slice
                if kw == 0:
                    tap = jnp.where(ok_left, tap, 0.0)
                elif kw == 2:
                    tap = jnp.where(ok_right, tap, 0.0)
                p_scr[t * Cin:(t + 1) * Cin, b * HW:(b + 1) * HW] = tap

    # Single MXU matmul: (Cout, K) @ (K, B*HW) -> (Cout, B*HW), f32 accumulate.
    acc = jnp.dot(w_ref[...], p_scr[...], preferred_element_type=jnp.float32)

    # Lane-dense stores (HW is a multiple of 128) into the (B, Cout, HW) slab.
    for b in range(B):
        o_ref[b] = acc[:, b * HW:(b + 1) * HW].astype(o_ref.dtype)


def conv2d_3x3_same(x_nchw, weight, bias):
    """nn.Conv2d(Cin, Cout, 3, padding=1) forward.

    x_nchw: (B, Cin, H, W) float32
    weight: (Cout, Cin, 3, 3) float32 (PyTorch OIHW layout)
    bias:   (Cout,) float32
    returns (B, Cout, H, W) float32
    """
    B, Cin, H, W = x_nchw.shape
    Cout = weight.shape[0]
    HW = H * W
    K = 9 * Cin + 1  # +1 for the folded bias

    # Flat, zero-padded input: pad the row-major H*W axis by W+1 on each side.
    # This is the only wrapper-side data op (~4.6 KiB) and replaces the old
    # 9x-expanded im2col slab.
    xf = jnp.pad(x_nchw.reshape(B, Cin, HW), ((0, 0), (0, 0), (W + 1, W + 1)))

    # Weights -> (Cout, 9*Cin), tap-major / cin-minor; append bias as last column.
    w2d = jnp.transpose(weight, (0, 2, 3, 1)).reshape(Cout, 9 * Cin)
    w_aug = jnp.concatenate([w2d, bias.reshape(Cout, 1)], axis=1)   # (Cout, K)

    out = pl.pallas_call(
        functools.partial(_conv_kernel, W=W),
        out_shape=jax.ShapeDtypeStruct((B, Cout, HW), jnp.float32),
        scratch_shapes=[pltpu.VMEM((K, B * HW), jnp.float32)],
    )(xf, w_aug)

    # Pure contiguous reshape back to NCHW — no transpose, no extra HBM pass.
    return out.reshape(B, Cout, H, W)


if __name__ == "__main__":
    key = jax.random.PRNGKey(0)
    k_x, k_w, k_b = jax.random.split(key, 3)

    B, Cin, Cout, H, W = 2, 2, 2, 16, 16

    # Deterministic synthetic parameters (shapes from nn.Conv2d(2, 2, 3, padding=1)).
    fan_in = Cin * 3 * 3
    bound = 1.0 / (fan_in ** 0.5)
    weight = jax.random.uniform(k_w, (Cout, Cin, 3, 3), jnp.float32, -bound, bound)
    bias = jax.random.uniform(k_b, (Cout,), jnp.float32, -bound, bound)

    x = jax.random.normal(k_x, (B, Cin, H, W), jnp.float32)

    out = conv2d_3x3_same(x, weight, bias)
    out = jax.block_until_ready(out)

    # Reference check against XLA's conv (same NCHW/OIHW semantics as PyTorch).
    ref = jax.lax.conv_general_dilated(
        x, weight, window_strides=(1, 1), padding=((1, 1), (1, 1)),
        dimension_numbers=("NCHW", "OIHW", "NCHW"),
    ) + bias.reshape(1, Cout, 1, 1)
    assert out.shape == (B, Cout, H, W)
    assert jnp.allclose(out, ref, atol=1e-5, rtol=1e-5)

    print("KERNEL_OK")
</pallas_src>

<mosaic_0001>
module attributes {stable_mosaic.version = 11 : i64} {
  func.func @_conv_kernel(%arg0: memref<2x2x290xf32, #tpu.memory_space<vmem>>, %arg1: memref<2x19xf32, #tpu.memory_space<vmem>>, %arg2: memref<2x2x256xf32, #tpu.memory_space<vmem>>, %arg3: memref<19x512xf32, #tpu.memory_space<vmem>>) attributes {dimension_semantics = [], scalar_prefetch = 0 : i64, scratch_operands = 1 : i64, tpu.core_type = #tpu.core_type<tc>} {
    %0 = tpu.iota {dimensions = array<i32: 1>} : vector<1x256xi32>
    %c16_i32 = arith.constant 16 : i32
    %c0_i32 = arith.constant 0 : i32
    %1 = arith.cmpi eq, %c16_i32, %c0_i32 : i32
    %c1_i32 = arith.constant 1 : i32
    %2 = arith.select %1, %c1_i32, %c16_i32 : i32
    %3 = vector.broadcast %2 : i32 to vector<1x256xi32>
    %4 = arith.remsi %0, %3 : vector<1x256xi32>
    %c0_i32_0 = arith.constant 0 : i32
    %5 = vector.broadcast %c0_i32_0 : i32 to vector<1x256xi32>
    %6 = arith.cmpi ne, %4, %5 : vector<1x256xi32>
    %c0_i32_1 = arith.constant 0 : i32
    %7 = vector.broadcast %c0_i32_1 : i32 to vector<1x256xi32>
    %8 = arith.cmpi slt, %4, %7 : vector<1x256xi32>
    %c0_i32_2 = arith.constant 0 : i32
    %9 = arith.cmpi slt, %2, %c0_i32_2 : i32
    %10 = vector.broadcast %9 : i1 to vector<1x256xi1>
    %11 = vector.broadcast %10 : vector<1x256xi1> to vector<1x256xi1>
    %12 = arith.xori %8, %11 : vector<1x256xi1>
    %13 = arith.andi %12, %6 : vector<1x256xi1>
    %14 = vector.broadcast %2 : i32 to vector<1x256xi32>
    %15 = arith.addi %4, %14 : vector<1x256xi32>
    %16 = arith.select %13, %15, %4 : vector<1x256xi1>, vector<1x256xi32>
    %c0_i32_3 = arith.constant 0 : i32
    %17 = vector.broadcast %c0_i32_3 : i32 to vector<1x256xi32>
    %18 = arith.cmpi ne, %16, %17 : vector<1x256xi32>
    %c15_i32 = arith.constant 15 : i32
    %19 = vector.broadcast %c15_i32 : i32 to vector<1x256xi32>
    %20 = arith.cmpi ne, %16, %19 : vector<1x256xi32>
    %cst = arith.constant 1.000000e+00 : f32
    %21 = vector.broadcast %cst : f32 to vector<1x512xf32>
    %c18 = arith.constant 18 : index
    %c0 = arith.constant 0 : index
    %22 = vector.load %arg3[%c18, %c0] : memref<19x512xf32, #tpu.memory_space<vmem>>, vector<1x512xf32>
    tpu.vector_store %arg3[%c18, %c0], %21 {strides = array<i32>} : memref<19x512xf32, #tpu.memory_space<vmem>>, vector<1x512xf32>,
    %c0_4 = arith.constant 0 : index
    %c0_5 = arith.constant 0 : index
    %c0_6 = arith.constant 0 : index
    %23 = vector.load %arg0[%c0_4, %c0_5, %c0_6] : memref<2x2x290xf32, #tpu.memory_space<vmem>>, vector<1x2x256xf32>
    %24 = vector.shape_cast %23 : vector<1x2x256xf32> to vector<2x256xf32>
    %cst_7 = arith.constant 0.000000e+00 : f32
    %25 = vector.shape_cast %18 : vector<1x256xi1> to vector<1x256xi1>
    %26 = vector.broadcast %25 : vector<1x256xi1> to vector<2x256xi1>
    %27 = vector.broadcast %cst_7 : f32 to vector<2x256xf32>
    %28 = arith.select %26, %24, %27 : vector<2x256xi1>, vector<2x256xf32>
    %c0_8 = arith.constant 0 : index
    %c0_9 = arith.constant 0 : index
    %29 = vector.load %arg3[%c0_8, %c0_9] : memref<19x512xf32, #tpu.memory_space<vmem>>, vector<2x256xf32>
    tpu.vector_store %arg3[%c0_8, %c0_9], %28 {strides = array<i32>} : memref<19x512xf32, #tpu.memory_space<vmem>>, vector<2x256xf32>,
    %c0_10 = arith.constant 0 : index
    %c0_11 = arith.constant 0 : index
    %c1 = arith.constant 1 : index
    %30 = vector.load %arg0[%c0_10, %c0_11, %c1] : memref<2x2x290xf32, #tpu.memory_space<vmem>>, vector<1x2x256xf32>
    %31 = vector.shape_cast %30 : vector<1x2x256xf32> to vector<2x256xf32>
    %c2 = arith.constant 2 : index
    %c0_12 = arith.constant 0 : index
    %32 = vector.load %arg3[%c2, %c0_12] : memref<19x512xf32, #tpu.memory_space<vmem>>, vector<2x256xf32>
    tpu.vector_store %arg3[%c2, %c0_12], %31 {strides = array<i32>} : memref<19x512xf32, #tpu.memory_space<vmem>>, vector<2x256xf32>,
    %c0_13 = arith.constant 0 : index
    %c0_14 = arith.constant 0 : index
    %c2_15 = arith.constant 2 : index
    %33 = vector.load %arg0[%c0_13, %c0_14, %c2_15] : memref<2x2x290xf32, #tpu.memory_space<vmem>>, vector<1x2x256xf32>
    %34 = vector.shape_cast %33 : vector<1x2x256xf32> to vector<2x256xf32>
    %cst_16 = arith.constant 0.000000e+00 : f32
    %35 = vector.shape_cast %20 : vector<1x256xi1> to vector<1x256xi1>
    %36 = vector.broadcast %35 : vector<1x256xi1> to vector<2x256xi1>
    %37 = vector.broadcast %cst_16 : f32 to vector<2x256xf32>
    %38 = arith.select %36, %34, %37 : vector<2x256xi1>, vector<2x256xf32>
    %c4 = arith.constant 4 : index
    %c0_17 = arith.constant 0 : index
    %39 = vector.load %arg3[%c4, %c0_17] : memref<19x512xf32, #tpu.memory_space<vmem>>, vector<2x256xf32>
    tpu.vector_store %arg3[%c4, %c0_17], %38 {strides = array<i32>} : memref<19x512xf32, #tpu.memory_space<vmem>>, vector<2x256xf32>,
    %c0_18 = arith.constant 0 : index
    %c0_19 = arith.constant 0 : index
    %c16 = arith.constant 16 : index
    %40 = vector.load %arg0[%c0_18, %c0_19, %c16] : memref<2x2x290xf32, #tpu.memory_space<vmem>>, vector<1x2x256xf32>
    %41 = vector.shape_cast %40 : vector<1x2x256xf32> to vector<2x256xf32>
    %cst_20 = arith.constant 0.000000e+00 : f32
    %42 = vector.shape_cast %18 : vector<1x256xi1> to vector<1x256xi1>
    %43 = vector.broadcast %42 : vector<1x256xi1> to vector<2x256xi1>
    %44 = vector.broadcast %cst_20 : f32 to vector<2x256xf32>
    %45 = arith.select %43, %41, %44 : vector<2x256xi1>, vector<2x256xf32>
    %c6 = arith.constant 6 : index
    %c0_21 = arith.constant 0 : index
    %46 = vector.load %arg3[%c6, %c0_21] : memref<19x512xf32, #tpu.memory_space<vmem>>, vector<2x256xf32>
    tpu.vector_store %arg3[%c6, %c0_21], %45 {strides = array<i32>} : memref<19x512xf32, #tpu.memory_space<vmem>>, vector<2x256xf32>,
    %c0_22 = arith.constant 0 : index
    %c0_23 = arith.constant 0 : index
    %c17 = arith.constant 17 : index
    %47 = vector.load %arg0[%c0_22, %c0_23, %c17] : memref<2x2x290xf32, #tpu.memory_space<vmem>>, vector<1x2x256xf32>
    %48 = vector.shape_cast %47 : vector<1x2x256xf32> to vector<2x256xf32>
    %c8 = arith.constant 8 : index
    %c0_24 = arith.constant 0 : index
    %49 = vector.load %arg3[%c8, %c0_24] : memref<19x512xf32, #tpu.memory_space<vmem>>, vector<2x256xf32>
    tpu.vector_store %arg3[%c8, %c0_24], %48 {strides = array<i32>} : memref<19x512xf32, #tpu.memory_space<vmem>>, vector<2x256xf32>,
    %c0_25 = arith.constant 0 : index
    %c0_26 = arith.constant 0 : index
    %c18_27 = arith.constant 18 : index
    %50 = vector.load %arg0[%c0_25, %c0_26, %c18_27] : memref<2x2x290xf32, #tpu.memory_space<vmem>>, vector<1x2x256xf32>
    %51 = vector.shape_cast %50 : vector<1x2x256xf32> to vector<2x256xf32>
    %cst_28 = arith.constant 0.000000e+00 : f32
    %52 = vector.shape_cast %20 : vector<1x256xi1> to vector<1x256xi1>
    %53 = vector.broadcast %52 : vector<1x256xi1> to vector<2x256xi1>
    %54 = vector.broadcast %cst_28 : f32 to vector<2x256xf32>
    %55 = arith.select %53, %51, %54 : vector<2x256xi1>, vector<2x256xf32>
    %c10 = arith.constant 10 : index
    %c0_29 = arith.constant 0 : index
    %56 = vector.load %arg3[%c10, %c0_29] : memref<19x512xf32, #tpu.memory_space<vmem>>, vector<2x256xf32>
    tpu.vector_store %arg3[%c10, %c0_29], %55 {strides = array<i32>} : memref<19x512xf32, #tpu.memory_space<vmem>>, vector<2x256xf32>,
    %c0_30 = arith.constant 0 : index
    %c0_31 = arith.constant 0 : index
    %c32 = arith.constant 32 : index
    %57 = vector.load %arg0[%c0_30, %c0_31, %c32] : memref<2x2x290xf32, #tpu.memory_space<vmem>>, vector<1x2x256xf32>
    %58 = vector.shape_cast %57 : vector<1x2x256xf32> to vector<2x256xf32>
    %cst_32 = arith.constant 0.000000e+00 : f32
    %59 = vector.shape_cast %18 : vector<1x256xi1> to vector<1x256xi1>
    %60 = vector.broadcast %59 : vector<1x256xi1> to vector<2x256xi1>
    %61 = vector.broadcast %cst_32 : f32 to vector<2x256xf32>
    %62 = arith.select %60, %58, %61 : vector<2x256xi1>, vector<2x256xf32>
    %c12 = arith.constant 12 : index
    %c0_33 = arith.constant 0 : index
    %63 = vector.load %arg3[%c12, %c0_33] : memref<19x512xf32, #tpu.memory_space<vmem>>, vector<2x256xf32>
    tpu.vector_store %arg3[%c12, %c0_33], %62 {strides = array<i32>} : memref<19x512xf32, #tpu.memory_space<vmem>>, vector<2x256xf32>,
    %c0_34 = arith.constant 0 : index
    %c0_35 = arith.constant 0 : index
    %c33 = arith.constant 33 : index
    %64 = vector.load %arg0[%c0_34, %c0_35, %c33] : memref<2x2x290xf32, #tpu.memory_space<vmem>>, vector<1x2x256xf32>
    %65 = vector.shape_cast %64 : vector<1x2x256xf32> to vector<2x256xf32>
    %c14 = arith.constant 14 : index
    %c0_36 = arith.constant 0 : index
    %66 = vector.load %arg3[%c14, %c0_36] : memref<19x512xf32, #tpu.memory_space<vmem>>, vector<2x256xf32>
    tpu.vector_store %arg3[%c14, %c0_36], %65 {strides = array<i32>} : memref<19x512xf32, #tpu.memory_space<vmem>>, vector<2x256xf32>,
    %c0_37 = arith.constant 0 : index
    %c0_38 = arith.constant 0 : index
    %c34 = arith.constant 34 : index
    %67 = vector.load %arg0[%c0_37, %c0_38, %c34] : memref<2x2x290xf32, #tpu.memory_space<vmem>>, vector<1x2x256xf32>
    %68 = vector.shape_cast %67 : vector<1x2x256xf32> to vector<2x256xf32>
    %cst_39 = arith.constant 0.000000e+00 : f32
    %69 = vector.shape_cast %20 : vector<1x256xi1> to vector<1x256xi1>
    %70 = vector.broadcast %69 : vector<1x256xi1> to vector<2x256xi1>
    %71 = vector.broadcast %cst_39 : f32 to vector<2x256xf32>
    %72 = arith.select %70, %68, %71 : vector<2x256xi1>, vector<2x256xf32>
    %c16_40 = arith.constant 16 : index
    %c0_41 = arith.constant 0 : index
    %73 = vector.load %arg3[%c16_40, %c0_41] : memref<19x512xf32, #tpu.memory_space<vmem>>, vector<2x256xf32>
    tpu.vector_store %arg3[%c16_40, %c0_41], %72 {strides = array<i32>} : memref<19x512xf32, #tpu.memory_space<vmem>>, vector<2x256xf32>,
    %c1_42 = arith.constant 1 : index
    %c0_43 = arith.constant 0 : index
    %c0_44 = arith.constant 0 : index
    %74 = vector.load %arg0[%c1_42, %c0_43, %c0_44] : memref<2x2x290xf32, #tpu.memory_space<vmem>>, vector<1x2x256xf32>
    %75 = vector.shape_cast %74 : vector<1x2x256xf32> to vector<2x256xf32>
    %cst_45 = arith.constant 0.000000e+00 : f32
    %76 = vector.shape_cast %18 : vector<1x256xi1> to vector<1x256xi1>
    %77 = vector.broadcast %76 : vector<1x256xi1> to vector<2x256xi1>
    %78 = vector.broadcast %cst_45 : f32 to vector<2x256xf32>
    %79 = arith.select %77, %75, %78 : vector<2x256xi1>, vector<2x256xf32>
    %c0_46 = arith.constant 0 : index
    %c256 = arith.constant 256 : index
    %80 = vector.load %arg3[%c0_46, %c256] : memref<19x512xf32, #tpu.memory_space<vmem>>, vector<2x256xf32>
    tpu.vector_store %arg3[%c0_46, %c256], %79 {strides = array<i32>} : memref<19x512xf32, #tpu.memory_space<vmem>>, vector<2x256xf32>,
    %c1_47 = arith.constant 1 : index
    %c0_48 = arith.constant 0 : index
    %c1_49 = arith.constant 1 : index
    %81 = vector.load %arg0[%c1_47, %c0_48, %c1_49] : memref<2x2x290xf32, #tpu.memory_space<vmem>>, vector<1x2x256xf32>
    %82 = vector.shape_cast %81 : vector<1x2x256xf32> to vector<2x256xf32>
    %c2_50 = arith.constant 2 : index
    %c256_51 = arith.constant 256 : index
    %83 = vector.load %arg3[%c2_50, %c256_51] : memref<19x512xf32, #tpu.memory_space<vmem>>, vector<2x256xf32>
    tpu.vector_store %arg3[%c2_50, %c256_51], %82 {strides = array<i32>} : memref<19x512xf32, #tpu.memory_space<vmem>>, vector<2x256xf32>,
    %c1_52 = arith.constant 1 : index
    %c0_53 = arith.constant 0 : index
    %c2_54 = arith.constant 2 : index
    %84 = vector.load %arg0[%c1_52, %c0_53, %c2_54] : memref<2x2x290xf32, #tpu.memory_space<vmem>>, vector<1x2x256xf32>
    %85 = vector.shape_cast %84 : vector<1x2x256xf32> to vector<2x256xf32>
    %cst_55 = arith.constant 0.000000e+00 : f32
    %86 = vector.shape_cast %20 : vector<1x256xi1> to vector<1x256xi1>
    %87 = vector.broadcast %86 : vector<1x256xi1> to vector<2x256xi1>
    %88 = vector.broadcast %cst_55 : f32 to vector<2x256xf32>
    %89 = arith.select %87, %85, %88 : vector<2x256xi1>, vector<2x256xf32>
    %c4_56 = arith.constant 4 : index
    %c256_57 = arith.constant 256 : index
    %90 = vector.load %arg3[%c4_56, %c256_57] : memref<19x512xf32, #tpu.memory_space<vmem>>, vector<2x256xf32>
    tpu.vector_store %arg3[%c4_56, %c256_57], %89 {strides = array<i32>} : memref<19x512xf32, #tpu.memory_space<vmem>>, vector<2x256xf32>,
    %c1_58 = arith.constant 1 : index
    %c0_59 = arith.constant 0 : index
    %c16_60 = arith.constant 16 : index
    %91 = vector.load %arg0[%c1_58, %c0_59, %c16_60] : memref<2x2x290xf32, #tpu.memory_space<vmem>>, vector<1x2x256xf32>
    %92 = vector.shape_cast %91 : vector<1x2x256xf32> to vector<2x256xf32>
    %cst_61 = arith.constant 0.000000e+00 : f32
    %93 = vector.shape_cast %18 : vector<1x256xi1> to vector<1x256xi1>
    %94 = vector.broadcast %93 : vector<1x256xi1> to vector<2x256xi1>
    %95 = vector.broadcast %cst_61 : f32 to vector<2x256xf32>
    %96 = arith.select %94, %92, %95 : vector<2x256xi1>, vector<2x256xf32>
    %c6_62 = arith.constant 6 : index
    %c256_63 = arith.constant 256 : index
    %97 = vector.load %arg3[%c6_62, %c256_63] : memref<19x512xf32, #tpu.memory_space<vmem>>, vector<2x256xf32>
    tpu.vector_store %arg3[%c6_62, %c256_63], %96 {strides = array<i32>} : memref<19x512xf32, #tpu.memory_space<vmem>>, vector<2x256xf32>,
    %c1_64 = arith.constant 1 : index
    %c0_65 = arith.constant 0 : index
    %c17_66 = arith.constant 17 : index
    %98 = vector.load %arg0[%c1_64, %c0_65, %c17_66] : memref<2x2x290xf32, #tpu.memory_space<vmem>>, vector<1x2x256xf32>
    %99 = vector.shape_cast %98 : vector<1x2x256xf32> to vector<2x256xf32>
    %c8_67 = arith.constant 8 : index
    %c256_68 = arith.constant 256 : index
    %100 = vector.load %arg3[%c8_67, %c256_68] : memref<19x512xf32, #tpu.memory_space<vmem>>, vector<2x256xf32>
    tpu.vector_store %arg3[%c8_67, %c256_68], %99 {strides = array<i32>} : memref<19x512xf32, #tpu.memory_space<vmem>>, vector<2x256xf32>,
    %c1_69 = arith.constant 1 : index
    %c0_70 = arith.constant 0 : index
    %c18_71 = arith.constant 18 : index
    %101 = vector.load %arg0[%c1_69, %c0_70, %c18_71] : memref<2x2x290xf32, #tpu.memory_space<vmem>>, vector<1x2x256xf32>
    %102 = vector.shape_cast %101 : vector<1x2x256xf32> to vector<2x256xf32>
    %cst_72 = arith.constant 0.000000e+00 : f32
    %103 = vector.shape_cast %20 : vector<1x256xi1> to vector<1x256xi1>
    %104 = vector.broadcast %103 : vector<1x256xi1> to vector<2x256xi1>
    %105 = vector.broadcast %cst_72 : f32 to vector<2x256xf32>
    %106 = arith.select %104, %102, %105 : vector<2x256xi1>, vector<2x256xf32>
    %c10_73 = arith.constant 10 : index
    %c256_74 = arith.constant 256 : index
    %107 = vector.load %arg3[%c10_73, %c256_74] : memref<19x512xf32, #tpu.memory_space<vmem>>, vector<2x256xf32>
    tpu.vector_store %arg3[%c10_73, %c256_74], %106 {strides = array<i32>} : memref<19x512xf32, #tpu.memory_space<vmem>>, vector<2x256xf32>,
    %c1_75 = arith.constant 1 : index
    %c0_76 = arith.constant 0 : index
    %c32_77 = arith.constant 32 : index
    %108 = vector.load %arg0[%c1_75, %c0_76, %c32_77] : memref<2x2x290xf32, #tpu.memory_space<vmem>>, vector<1x2x256xf32>
    %109 = vector.shape_cast %108 : vector<1x2x256xf32> to vector<2x256xf32>
    %cst_78 = arith.constant 0.000000e+00 : f32
    %110 = vector.shape_cast %18 : vector<1x256xi1> to vector<1x256xi1>
    %111 = vector.broadcast %110 : vector<1x256xi1> to vector<2x256xi1>
    %112 = vector.broadcast %cst_78 : f32 to vector<2x256xf32>
    %113 = arith.select %111, %109, %112 : vector<2x256xi1>, vector<2x256xf32>
    %c12_79 = arith.constant 12 : index
    %c256_80 = arith.constant 256 : index
    %114 = vector.load %arg3[%c12_79, %c256_80] : memref<19x512xf32, #tpu.memory_space<vmem>>, vector<2x256xf32>
    tpu.vector_store %arg3[%c12_79, %c256_80], %113 {strides = array<i32>} : memref<19x512xf32, #tpu.memory_space<vmem>>, vector<2x256xf32>,
    %c1_81 = arith.constant 1 : index
    %c0_82 = arith.constant 0 : index
    %c33_83 = arith.constant 33 : index
    %115 = vector.load %arg0[%c1_81, %c0_82, %c33_83] : memref<2x2x290xf32, #tpu.memory_space<vmem>>, vector<1x2x256xf32>
    %116 = vector.shape_cast %115 : vector<1x2x256xf32> to vector<2x256xf32>
    %c14_84 = arith.constant 14 : index
    %c256_85 = arith.constant 256 : index
    %117 = vector.load %arg3[%c14_84, %c256_85] : memref<19x512xf32, #tpu.memory_space<vmem>>, vector<2x256xf32>
    tpu.vector_store %arg3[%c14_84, %c256_85], %116 {strides = array<i32>} : memref<19x512xf32, #tpu.memory_space<vmem>>, vector<2x256xf32>,
    %c1_86 = arith.constant 1 : index
    %c0_87 = arith.constant 0 : index
    %c34_88 = arith.constant 34 : index
    %118 = vector.load %arg0[%c1_86, %c0_87, %c34_88] : memref<2x2x290xf32, #tpu.memory_space<vmem>>, vector<1x2x256xf32>
    %119 = vector.shape_cast %118 : vector<1x2x256xf32> to vector<2x256xf32>
    %cst_89 = arith.constant 0.000000e+00 : f32
    %120 = vector.shape_cast %20 : vector<1x256xi1> to vector<1x256xi1>
    %121 = vector.broadcast %120 : vector<1x256xi1> to vector<2x256xi1>
    %122 = vector.broadcast %cst_89 : f32 to vector<2x256xf32>
    %123 = arith.select %121, %119, %122 : vector<2x256xi1>, vector<2x256xf32>
    %c16_90 = arith.constant 16 : index
    %c256_91 = arith.constant 256 : index
    %124 = vector.load %arg3[%c16_90, %c256_91] : memref<19x512xf32, #tpu.memory_space<vmem>>, vector<2x256xf32>
    tpu.vector_store %arg3[%c16_90, %c256_91], %123 {strides = array<i32>} : memref<19x512xf32, #tpu.memory_space<vmem>>, vector<2x256xf32>,
    %c0_92 = arith.constant 0 : index
    %c0_93 = arith.constant 0 : index
    %125 = vector.load %arg1[%c0_92, %c0_93] : memref<2x19xf32, #tpu.memory_space<vmem>>, vector<2x19xf32>
    %c0_94 = arith.constant 0 : index
    %c0_95 = arith.constant 0 : index
    %126 = vector.load %arg3[%c0_94, %c0_95] : memref<19x512xf32, #tpu.memory_space<vmem>>, vector<19x512xf32>
    %cst_96 = arith.constant dense<0.000000e+00> : vector<2x512xf32>
    %127 = tpu.matmul %125, %126, %cst_96 {dimension_numbers = #tpu.dot_dimension_numbers<[1], [0], [0], [1], [0, 0, 1, 1], [], []>} : vector<2x19xf32>, vector<19x512xf32>, vector<2x512xf32> -> vector<2x512xf32>
    %128 = vector.extract_strided_slice %127 {offsets = [0, 0], sizes = [2, 256], strides = [1, 1]} : vector<2x512xf32> to vector<2x256xf32>
    %c0_97 = arith.constant 0 : index
    %c0_98 = arith.constant 0 : index
    %c0_99 = arith.constant 0 : index
    %129 = vector.load %arg2[%c0_97, %c0_98, %c0_99] : memref<2x2x256xf32, #tpu.memory_space<vmem>>, vector<1x2x256xf32>
    %130 = vector.shape_cast %129 : vector<1x2x256xf32> to vector<2x256xf32>
    %131 = vector.shape_cast %128 : vector<2x256xf32> to vector<1x2x256xf32>
    tpu.vector_store %arg2[%c0_97, %c0_98, %c0_99], %131 {strides = array<i32>} : memref<2x2x256xf32, #tpu.memory_space<vmem>>, vector<1x2x256xf32>,
    %132 = vector.extract_strided_slice %127 {offsets = [0, 256], sizes = [2, 256], strides = [1, 1]} : vector<2x512xf32> to vector<2x256xf32>
    %c1_100 = arith.constant 1 : index
    %c0_101 = arith.constant 0 : index
    %c0_102 = arith.constant 0 : index
    %133 = vector.load %arg2[%c1_100, %c0_101, %c0_102] : memref<2x2x256xf32, #tpu.memory_space<vmem>>, vector<1x2x256xf32>
    %134 = vector.shape_cast %133 : vector<1x2x256xf32> to vector<2x256xf32>
    %135 = vector.shape_cast %132 : vector<2x256xf32> to vector<1x2x256xf32>
    tpu.vector_store %arg2[%c1_100, %c0_101, %c0_102], %135 {strides = array<i32>} : memref<2x2x256xf32, #tpu.memory_space<vmem>>, vector<1x2x256xf32>,
    return
  }
}

</mosaic_0001>

<llo_original>
// kernel: tpu_custom_call.1
$region0: #{tpu_custom_call.1}
  #allocation0 [shape = 'u32[]', space=smem, size = 0x4, offset = 0x4, fixed_abs, tag = 'smem constant byte address 0x4 - core index']
  #allocation1 [shape = 'u32[144,128]{1,0:T(1,128)}', space=vmem, size = 0x12000, scoped, tag = 'internal scratch']
  #allocation2 [shape = 'f32[19,512]{1,0:T(8,128)}', space=vmem, size = 0xc000, scoped, tag = 'scratch operand']
  %s0 = inlined_call_operand.hbm [shape: f32[2,2,290], index: 0, kind: input, shape index: {}]
  %s1 = inlined_call_operand.vmem [shape: f32[2,19], index: 1, kind: input, shape index: {}]
  %s2 = inlined_call_operand.hbm [shape: f32[2,2,256], index: 2, kind: output, shape index: {}]
  %s3 = sld [smem:[#allocation0]]
  $region22: #{tpu_custom_call.1} parent=0
    _
  %s5 = ssub.s32 1, %s3
  %s6 = scalar_select 0, %s5, %s3
  $region1: #{tpu_custom_call.1} parent=0
    #allocation3 [shape = 'u8[6144]{0}', space=vmem, size = 0x1800, scoped, tag = 'input window, operand 0, single buffered']
    #allocation4 [shape = 's32[1]{0}', space=sflag, size = 0x4, scoped, tag = 'scoped memory for tpu_custom_call.1']
    #allocation5 [shape = 's32[1]{0}', space=sflag, size = 0x4, scoped, tag = 'scoped memory for tpu_custom_call.1']
    #allocation6 [shape = 'u8[4096]{0}', space=vmem, size = 0x1000, scoped, tag = 'output window, operand 0, single buffered']
    %7 = vsyncpa [#allocation4], 0
    %8 = vsyncpa [#allocation5], 0
    // Predicated region
    $region2: #{tpu_custom_call.1} parent=1 // pred_check
      _
    $region3: #{tpu_custom_call.1} parent=1 // pred_check_branch
      %10 = sbr.rel (0) target = $region5
    $region4: #{tpu_custom_call.1} parent=1 // pred_region
      %s12 = ssub.s32 192, 192
      %13 = vsyncadd [#allocation4], %s12
      %s14 = sshll.u32 [#allocation3], 4
      %s15 = int_to_ptr.vmem [resolvable:$true] %s14
      %20 = dma.hbm_to_vmem [thread:$0]  %s0, 192, %s15, [#allocation4], 96, 96, 6
    $region5: #{tpu_custom_call.1} parent=1 // pred_fallthru
      _
    // Predicated region
    $region6: #{tpu_custom_call.1} parent=1 // pred_check
      _
    $region7: #{tpu_custom_call.1} parent=1 // pred_check_branch
      %22 = sbr.rel (0) target = $region9
    $region8: #{tpu_custom_call.1} parent=1 // pred_region
      _
    $region9: #{tpu_custom_call.1} parent=1 // pred_fallthru
      _
    // Predicated region
    $region10: #{tpu_custom_call.1} parent=1 // pred_check
      _
    $region11: #{tpu_custom_call.1} parent=1 // pred_check_branch
      %24 = sbr.rel (0) target = $region13
    $region12: #{tpu_custom_call.1} parent=1 // pred_region
      %25 = dma.done [#allocation4], 192
    $region13: #{tpu_custom_call.1} parent=1 // pred_fallthru
      _
    %v26 = vlaneseq
    %v27 = vand.u32 %v26, 127
    %v28 = vadd.s32 %v27, 128
    %vm29 = vcmp.lt.s32.totalorder %v27, 0
    %v30 = vsub.s32 0, %v27
    %v31 = vsel %vm29, %v30, %v27
    %v32 = vshrl.u32 %v31, 4
    %v33 = vand.u32 %v31, 15
    %v34 = vsub.s32 0, %v33
    %v35 = vsel %vm29, %v34, %v33
    %vm36 = vcmp.lt.s32.totalorder %v28, 0
    %v37 = vsub.s32 0, %v28
    %v38 = vsel %vm36, %v37, %v28
    %v39 = vshrl.u32 %v38, 4
    %v40 = vand.u32 %v38, 15
    %v41 = vsub.s32 0, %v40
    %v42 = vsel %vm36, %v41, %v40
    %vm43 = vcmp.ne.s32.totalorder %v35, 0
    %vm44 = vcmp.ne.s32.totalorder %v42, 0
    %vm45 = vcmp.lt.s32.totalorder %v35, 0
    %vm46 = vcmp.lt.s32.totalorder %v42, 0
    %vm47 = vmand %vm45, %vm43
    %vm48 = vmand %vm46, %vm44
    %v49 = vadd.s32 %v35, 16
    %v50 = vadd.s32 %v42, 16
    %v51 = vsel %vm47, %v49, %v35
    %v52 = vsel %vm48, %v50, %v42
    %vm53 = vcmp.ne.s32.totalorder %v51, 0
    %vm54 = vcmp.ne.s32.totalorder %v52, 0
    %vm55 = vcmp.ne.s32.totalorder %v51, 15
    %vm56 = vcmp.ne.s32.totalorder %v52, 15
    %v57 = vlaneseq
    %vm58 = vcmp.ge.s32.totalorder %v57, 0
    %vm59 = vcmp.lt.s32.totalorder %v57, 512
    %vm60 = vmand %vm58, %vm59
    %s61 = scalar_lea.vmem [#allocation2], 66
    %62 = vst.msk [vmem:[%s61] ss:$8 sm:$0xf] %vm60, 1.0
    %63 = vst.msk [vmem:[%s61] ss:$8 sm:$0x0] %vm60, 1.0
    %v64 = vld [vmem:[#allocation3] sm:$0xf]
    %v65 = vsel %vm53, 1, 0
    %v66 = vsel %vm54, 1, 0
    %vm67 = vcmp.eq.s32.totalorder %v65, 1
    %vm68 = vcmp.eq.s32.totalorder %v66, 1
    %v71 = vunpack.c.l.s4 1983009808
    %v72 = vunpack.c.0.s8 %v71
    %v73 = vlaneseq
    %v74 = vshrl.u32 %v73, 7
    %v75 = vsub.s32 %v72, %v74
    %v76 = vrot.slane %v64, %v75
    %v77 = vcombine.high %v76, %v76
    %v80 = vsel %vm67, %v76, 0.0
    %v81 = vsel %vm68, %v77, 0.0
    %82 = vst [vmem:[#allocation2] sm:$0x3] %v80
    %83 = vst [vmem:[#allocation2 + $0x8] sm:$0x3] %v81
    %v84 = vld [vmem:[#allocation3] sm:$0x3f]
    %v86 = vcombine.low %v84, %v84
    %v88 = vunpack.c.l.s4 1983009808
    %v89 = vunpack.c.0.s8 %v88
    %v90 = vlaneseq
    %v91 = vshrl.u32 %v90, 7
    %v92 = vsub.s32 %v89, %v91
    %v93 = vrot.slane %v86, %v92
    %v95 = vunpack.c.l.s4 1983009808
    %v96 = vunpack.c.0.s8 %v95
    %v97 = vlaneseq
    %v98 = vshrl.u32 %v97, 7
    %v99 = vsub.s32 %v96, %v98
    %v100 = vrot.slane %v84, %v99
    %v101 = vcombine.high %v93, %v93
    %102 = vrot.lane.b32.xlu0 %v93, 127
    %v103 = vpop.permute.xlu0 %102
    %104 = vrot.lane.b32.xlu0 %v101, 127
    %v105 = vpop.permute.xlu0 %104
    %106 = vrot.lane.b32.xlu0 %v100, 127
    %v107 = vpop.permute.xlu0 %106
    %vm108 = vcmask 1039360
    %v109 = vsel %vm108, %v103, %v105
    %v110 = vsel %vm108, %v105, %v107
    %113 = vst [vmem:[#allocation2] sm:$0xc] %v109
    %114 = vst [vmem:[#allocation2 + $0x8] sm:$0xc] %v110
    %v115 = vld [vmem:[#allocation3] sm:$0x3f]
    %v116 = vsel %vm55, 1, 0
    %v117 = vsel %vm56, 1, 0
    %vm118 = vcmp.eq.s32.totalorder %v116, 1
    %vm119 = vcmp.eq.s32.totalorder %v117, 1
    %v121 = vcombine.high %v115, %v115
    %v123 = vunpack.c.l.s4 1983009808
    %v124 = vunpack.c.0.s8 %v123
    %v125 = vlaneseq
    %v126 = vshrl.u32 %v125, 7
    %v127 = vsub.s32 %v124, %v126
    %v128 = vrot.slane %v115, %v127
    %v130 = vunpack.c.l.s4 1983009808
    %v131 = vunpack.c.0.s8 %v130
    %v132 = vlaneseq
    %v133 = vshrl.u32 %v132, 7
    %v134 = vsub.s32 %v131, %v133
    %v135 = vrot.slane %v121, %v134
    %v136 = vcombine.high %v128, %v128
    %137 = vrot.lane.b32.xlu0 %v128, 126
    %v138 = vpop.permute.xlu0 %137
    %139 = vrot.lane.b32.xlu0 %v136, 126
    %v140 = vpop.permute.xlu0 %139
    %141 = vrot.lane.b32.xlu0 %v135, 126
    %v142 = vpop.permute.xlu0 %141
    %vm143 = vcmask 1031168
    %v144 = vsel %vm143, %v138, %v140
    %v145 = vsel %vm143, %v140, %v142
    %v148 = vsel %vm118, %v144, 0.0
    %v149 = vsel %vm119, %v145, 0.0
    %v152 = vrot.slane %v148, 4
    %v153 = vrot.slane %v149, 4
    %156 = vst [vmem:[#allocation2] sm:$0x30] %v152
    %157 = vst [vmem:[#allocation2 + $0x8] sm:$0x30] %v153
    %v158 = vld [vmem:[#allocation3] sm:$0x3f]
    %v160 = vcombine.high %v158, %v158
    %v162 = vunpack.c.l.s4 1983009808
    %v163 = vunpack.c.0.s8 %v162
    %v164 = vlaneseq
    %v165 = vshrl.u32 %v164, 7
    %v166 = vsub.s32 %v163, %v165
    %v167 = vrot.slane %v158, %v166
    %v169 = vunpack.c.l.s4 1983009808
    %v170 = vunpack.c.0.s8 %v169
    %v171 = vlaneseq
    %v172 = vshrl.u32 %v171, 7
    %v173 = vsub.s32 %v170, %v172
    %v174 = vrot.slane %v160, %v173
    %v175 = vcombine.high %v167, %v167
    %176 = vrot.lane.b32.xlu0 %v167, 112
    %v177 = vpop.permute.xlu0 %176
    %178 = vrot.lane.b32.xlu0 %v175, 112
    %v179 = vpop.permute.xlu0 %178
    %180 = vrot.lane.b32.xlu0 %v174, 112
    %v181 = vpop.permute.xlu0 %180
    %vm182 = vcmask 916480
    %v183 = vsel %vm182, %v177, %v179
    %v184 = vsel %vm182, %v179, %v181
    %v187 = vsel %vm67, %v183, 0.0
    %v188 = vsel %vm68, %v184, 0.0
    %v191 = vrot.slane %v187, 2
    %v192 = vrot.slane %v188, 2
    %195 = vst [vmem:[#allocation2] sm:$0xc0] %v191
    %196 = vst [vmem:[#allocation2 + $0x8] sm:$0xc0] %v192
    %v197 = vld [vmem:[#allocation3] sm:$0x3f]
    %v199 = vcombine.high %v197, %v197
    %v201 = vunpack.c.l.s4 1983009808
    %v202 = vunpack.c.0.s8 %v201
    %v203 = vlaneseq
    %v204 = vshrl.u32 %v203, 7
    %v205 = vsub.s32 %v202, %v204
    %v206 = vrot.slane %v197, %v205
    %v208 = vunpack.c.l.s4 1983009808
    %v209 = vunpack.c.0.s8 %v208
    %v210 = vlaneseq
    %v211 = vshrl.u32 %v210, 7
    %v212 = vsub.s32 %v209, %v211
    %v213 = vrot.slane %v199, %v212
    %v214 = vcombine.high %v206, %v206
    %215 = vrot.lane.b32.xlu0 %v206, 111
    %v216 = vpop.permute.xlu0 %215
    %217 = vrot.lane.b32.xlu0 %v214, 111
    %v218 = vpop.permute.xlu0 %217
    %219 = vrot.lane.b32.xlu0 %v213, 111
    %v220 = vpop.permute.xlu0 %219
    %vm221 = vcmask 908288
    %v222 = vsel %vm221, %v216, %v218
    %v223 = vsel %vm221, %v218, %v220
    %226 = vst [vmem:[#allocation2 + $0x20] sm:$0x3] %v222
    %227 = vst [vmem:[#allocation2 + $0x28] sm:$0x3] %v223
    %v228 = vld [vmem:[#allocation3] sm:$0x3f]
    %v230 = vcombine.high %v228, %v228
    %v232 = vunpack.c.l.s4 1983009808
    %v233 = vunpack.c.0.s8 %v232
    %v234 = vlaneseq
    %v235 = vshrl.u32 %v234, 7
    %v236 = vsub.s32 %v233, %v235
    %v237 = vrot.slane %v228, %v236
    %v239 = vunpack.c.l.s4 1983009808
    %v240 = vunpack.c.0.s8 %v239
    %v241 = vlaneseq
    %v242 = vshrl.u32 %v241, 7
    %v243 = vsub.s32 %v240, %v242
    %v244 = vrot.slane %v230, %v243
    %v245 = vcombine.high %v237, %v237
    %246 = vrot.lane.b32.xlu0 %v237, 110
    %v247 = vpop.permute.xlu0 %246
    %248 = vrot.lane.b32.xlu0 %v245, 110
    %v249 = vpop.permute.xlu0 %248
    %250 = vrot.lane.b32.xlu0 %v244, 110
    %v251 = vpop.permute.xlu0 %250
    %vm252 = vcmask 900096
    %v253 = vsel %vm252, %v247, %v249
    %v254 = vsel %vm252, %v249, %v251
    %v257 = vsel %vm118, %v253, 0.0
    %v258 = vsel %vm119, %v254, 0.0
    %v261 = vrot.slane %v257, 6
    %v262 = vrot.slane %v258, 6
    %265 = vst [vmem:[#allocation2 + $0x20] sm:$0xc] %v261
    %266 = vst [vmem:[#allocation2 + $0x28] sm:$0xc] %v262
    %v267 = vld [vmem:[#allocation3] sm:$0x3f]
    %v269 = vcombine.high %v267, %v267
    %v271 = vunpack.c.l.s4 1983009808
    %v272 = vunpack.c.0.s8 %v271
    %v273 = vlaneseq
    %v274 = vshrl.u32 %v273, 7
    %v275 = vsub.s32 %v272, %v274
    %v276 = vrot.slane %v267, %v275
    %v278 = vunpack.c.l.s4 1983009808
    %v279 = vunpack.c.0.s8 %v278
    %v280 = vlaneseq
    %v281 = vshrl.u32 %v280, 7
    %v282 = vsub.s32 %v279, %v281
    %v283 = vrot.slane %v269, %v282
    %v284 = vcombine.high %v276, %v276
    %285 = vrot.lane.b32.xlu0 %v276, 96
    %v286 = vpop.permute.xlu0 %285
    %287 = vrot.lane.b32.xlu0 %v284, 96
    %v288 = vpop.permute.xlu0 %287
    %289 = vrot.lane.b32.xlu0 %v283, 96
    %v290 = vpop.permute.xlu0 %289
    %vm291 = vcmask 785408
    %v292 = vsel %vm291, %v286, %v288
    %v293 = vsel %vm291, %v288, %v290
    %v296 = vsel %vm67, %v292, 0.0
    %v297 = vsel %vm68, %v293, 0.0
    %v300 = vrot.slane %v296, 4
    %v301 = vrot.slane %v297, 4
    %304 = vst [vmem:[#allocation2 + $0x20] sm:$0x30] %v300
    %305 = vst [vmem:[#allocation2 + $0x28] sm:$0x30] %v301
    %v306 = vld [vmem:[#allocation3] sm:$0x3f]
    %v308 = vcombine.low %v306, %v306
    %v310 = vunpack.c.l.s4 1983009808
    %v311 = vunpack.c.0.s8 %v310
    %v312 = vlaneseq
    %v313 = vshrl.u32 %v312, 7
    %v314 = vsub.s32 %v311, %v313
    %v315 = vrot.slane %v308, %v314
    %v317 = vunpack.c.l.s4 1983009808
    %v318 = vunpack.c.0.s8 %v317
    %v319 = vlaneseq
    %v320 = vshrl.u32 %v319, 7
    %v321 = vsub.s32 %v318, %v320
    %v322 = vrot.slane %v306, %v321
    %v323 = vcombine.low %v315, %v315
    %v324 = vcombine.low %v322, %v322
    %325 = vrot.lane.b32.xlu0 %v323, 95
    %v326 = vpop.permute.xlu0 %325
    %327 = vrot.lane.b32.xlu0 %v315, 95
    %v328 = vpop.permute.xlu0 %327
    %329 = vrot.lane.b32.xlu0 %v324, 95
    %v330 = vpop.permute.xlu0 %329
    %vm331 = vcmask 777216
    %v332 = vsel %vm331, %v326, %v328
    %v333 = vsel %vm331, %v328, %v330
    %336 = vst [vmem:[#allocation2 + $0x20] sm:$0xc0] %v332
    %337 = vst [vmem:[#allocation2 + $0x28] sm:$0xc0] %v333
    %v338 = vld [vmem:[#allocation3] sm:$0x3f]
    %v340 = vcombine.high %v338, %v338
    %v342 = vunpack.c.l.s4 1983009808
    %v343 = vunpack.c.0.s8 %v342
    %v344 = vlaneseq
    %v345 = vshrl.u32 %v344, 7
    %v346 = vsub.s32 %v343, %v345
    %v347 = vrot.slane %v338, %v346
    %v349 = vunpack.c.l.s4 1983009808
    %v350 = vunpack.c.0.s8 %v349
    %v351 = vlaneseq
    %v352 = vshrl.u32 %v351, 7
    %v353 = vsub.s32 %v350, %v352
    %v354 = vrot.slane %v340, %v353
    %v355 = vcombine.high %v347, %v347
    %356 = vrot.lane.b32.xlu0 %v347, 94
    %v357 = vpop.permute.xlu0 %356
    %358 = vrot.lane.b32.xlu0 %v355, 94
    %v359 = vpop.permute.xlu0 %358
    %360 = vrot.lane.b32.xlu0 %v354, 94
    %v361 = vpop.permute.xlu0 %360
    %vm362 = vcmask 769024
    %v363 = vsel %vm362, %v357, %v359
    %v364 = vsel %vm362, %v359, %v361
    %v367 = vsel %vm118, %v363, 0.0
    %v368 = vsel %vm119, %v364, 0.0
    %369 = vst [vmem:[#allocation2 + $0x40] sm:$0x3] %v367
    %370 = vst [vmem:[#allocation2 + $0x48] sm:$0x3] %v368
    %s371 = scalar_lea.vmem [#allocation3], 6
    %v372 = vld [vmem:[%s371] sm:$0xf]
    %v375 = vunpack.c.l.s4 1983009808
    %v376 = vunpack.c.0.s8 %v375
    %v377 = vlaneseq
    %v378 = vshrl.u32 %v377, 7
    %v379 = vsub.s32 %v376, %v378
    %v380 = vrot.slane %v372, %v379
    %v381 = vcombine.high %v380, %v380
    %v384 = vsel %vm67, %v380, 0.0
    %v385 = vsel %vm68, %v381, 0.0
    %386 = vst [vmem:[#allocation2 + $0x10] sm:$0x3] %v384
    %387 = vst [vmem:[#allocation2 + $0x18] sm:$0x3] %v385
    %v388 = vld [vmem:[%s371] sm:$0x3f]
    %v390 = vcombine.low %v388, %v388
    %v392 = vunpack.c.l.s4 1983009808
    %v393 = vunpack.c.0.s8 %v392
    %v394 = vlaneseq
    %v395 = vshrl.u32 %v394, 7
    %v396 = vsub.s32 %v393, %v395
    %v397 = vrot.slane %v390, %v396
    %v399 = vunpack.c.l.s4 1983009808
    %v400 = vunpack.c.0.s8 %v399
    %v401 = vlaneseq
    %v402 = vshrl.u32 %v401, 7
    %v403 = vsub.s32 %v400, %v402
    %v404 = vrot.slane %v388, %v403
    %v405 = vcombine.high %v397, %v397
    %406 = vrot.lane.b32.xlu0 %v397, 127
    %v407 = vpop.permute.xlu0 %406
    %408 = vrot.lane.b32.xlu0 %v405, 127
    %v409 = vpop.permute.xlu0 %408
    %410 = vrot.lane.b32.xlu0 %v404, 127
    %v411 = vpop.permute.xlu0 %410
    %v412 = vsel %vm108, %v407, %v409
    %v413 = vsel %vm108, %v409, %v411
    %416 = vst [vmem:[#allocation2 + $0x10] sm:$0xc] %v412
    %417 = vst [vmem:[#allocation2 + $0x18] sm:$0xc] %v413
    %v418 = vld [vmem:[%s371] sm:$0x3f]
    %v420 = vcombine.high %v418, %v418
    %v422 = vunpack.c.l.s4 1983009808
    %v423 = vunpack.c.0.s8 %v422
    %v424 = vlaneseq
    %v425 = vshrl.u32 %v424, 7
    %v426 = vsub.s32 %v423, %v425
    %v427 = vrot.slane %v418, %v426
    %v429 = vunpack.c.l.s4 1983009808
    %v430 = vunpack.c.0.s8 %v429
    %v431 = vlaneseq
    %v432 = vshrl.u32 %v431, 7
    %v433 = vsub.s32 %v430, %v432
    %v434 = vrot.slane %v420, %v433
    %v435 = vcombine.high %v427, %v427
    %436 = vrot.lane.b32.xlu0 %v427, 126
    %v437 = vpop.permute.xlu0 %436
    %438 = vrot.lane.b32.xlu0 %v435, 126
    %v439 = vpop.permute.xlu0 %438
    %440 = vrot.lane.b32.xlu0 %v434, 126
    %v441 = vpop.permute.xlu0 %440
    %v442 = vsel %vm143, %v437, %v439
    %v443 = vsel %vm143, %v439, %v441
    %v446 = vsel %vm118, %v442, 0.0
    %v447 = vsel %vm119, %v443, 0.0
    %v450 = vrot.slane %v446, 4
    %v451 = vrot.slane %v447, 4
    %454 = vst [vmem:[#allocation2 + $0x10] sm:$0x30] %v450
    %455 = vst [vmem:[#allocation2 + $0x18] sm:$0x30] %v451
    %v456 = vld [vmem:[%s371] sm:$0x3f]
    %v458 = vcombine.high %v456, %v456
    %v460 = vunpack.c.l.s4 1983009808
    %v461 = vunpack.c.0.s8 %v460
    %v462 = vlaneseq
    %v463 = vshrl.u32 %v462, 7
    %v464 = vsub.s32 %v461, %v463
    %v465 = vrot.slane %v456, %v464
    %v467 = vunpack.c.l.s4 1983009808
    %v468 = vunpack.c.0.s8 %v467
    %v469 = vlaneseq
    %v470 = vshrl.u32 %v469, 7
    %v471 = vsub.s32 %v468, %v470
    %v472 = vrot.slane %v458, %v471
    %v473 = vcombine.high %v465, %v465
    %474 = vrot.lane.b32.xlu0 %v465, 112
    %v475 = vpop.permute.xlu0 %474
    %476 = vrot.lane.b32.xlu0 %v473, 112
    %v477 = vpop.permute.xlu0 %476
    %478 = vrot.lane.b32.xlu0 %v472, 112
    %v479 = vpop.permute.xlu0 %478
    %v480 = vsel %vm182, %v475, %v477
    %v481 = vsel %vm182, %v477, %v479
    %v484 = vsel %vm67, %v480, 0.0
    %v485 = vsel %vm68, %v481, 0.0
    %v488 = vrot.slane %v484, 2
    %v489 = vrot.slane %v485, 2
    %492 = vst [vmem:[#allocation2 + $0x10] sm:$0xc0] %v488
    %493 = vst [vmem:[#allocation2 + $0x18] sm:$0xc0] %v489
    %v494 = vld [vmem:[%s371] sm:$0x3f]
    %v496 = vcombine.high %v494, %v494
    %v498 = vunpack.c.l.s4 1983009808
    %v499 = vunpack.c.0.s8 %v498
    %v500 = vlaneseq
    %v501 = vshrl.u32 %v500, 7
    %v502 = vsub.s32 %v499, %v501
    %v503 = vrot.slane %v494, %v502
    %v505 = vunpack.c.l.s4 1983009808
    %v506 = vunpack.c.0.s8 %v505
    %v507 = vlaneseq
    %v508 = vshrl.u32 %v507, 7
    %v509 = vsub.s32 %v506, %v508
    %v510 = vrot.slane %v496, %v509
    %v511 = vcombine.high %v503, %v503
    %512 = vrot.lane.b32.xlu0 %v503, 111
    %v513 = vpop.permute.xlu0 %512
    %514 = vrot.lane.b32.xlu0 %v511, 111
    %v515 = vpop.permute.xlu0 %514
    %516 = vrot.lane.b32.xlu0 %v510, 111
    %v517 = vpop.permute.xlu0 %516
    %v518 = vsel %vm221, %v513, %v515
    %v519 = vsel %vm221, %v515, %v517
    %522 = vst [vmem:[#allocation2 + $0x30] sm:$0x3] %v518
    %523 = vst [vmem:[#allocation2 + $0x38] sm:$0x3] %v519
    %v524 = vld [vmem:[%s371] sm:$0x3f]
    %v526 = vcombine.high %v524, %v524
    %v528 = vunpack.c.l.s4 1983009808
    %v529 = vunpack.c.0.s8 %v528
    %v530 = vlaneseq
    %v531 = vshrl.u32 %v530, 7
    %v532 = vsub.s32 %v529, %v531
    %v533 = vrot.slane %v524, %v532
    %v535 = vunpack.c.l.s4 1983009808
    %v536 = vunpack.c.0.s8 %v535
    %v537 = vlaneseq
    %v538 = vshrl.u32 %v537, 7
    %v539 = vsub.s32 %v536, %v538
    %v540 = vrot.slane %v526, %v539
    %v541 = vcombine.high %v533, %v533
    %542 = vrot.lane.b32.xlu0 %v533, 110
    %v543 = vpop.permute.xlu0 %542
    %544 = vrot.lane.b32.xlu0 %v541, 110
    %v545 = vpop.permute.xlu0 %544
    %546 = vrot.lane.b32.xlu0 %v540, 110
    %v547 = vpop.permute.xlu0 %546
    %v548 = vsel %vm252, %v543, %v545
    %v549 = vsel %vm252, %v545, %v547
    %v552 = vsel %vm118, %v548, 0.0
    %v553 = vsel %vm119, %v549, 0.0
    %v556 = vrot.slane %v552, 6
    %v557 = vrot.slane %v553, 6
    %560 = vst [vmem:[#allocation2 + $0x30] sm:$0xc] %v556
    %561 = vst [vmem:[#allocation2 + $0x38] sm:$0xc] %v557
    %v562 = vld [vmem:[%s371] sm:$0x3f]
    %v564 = vcombine.high %v562, %v562
    %v566 = vunpack.c.l.s4 1983009808
    %v567 = vunpack.c.0.s8 %v566
    %v568 = vlaneseq
    %v569 = vshrl.u32 %v568, 7
    %v570 = vsub.s32 %v567, %v569
    %v571 = vrot.slane %v562, %v570
    %v573 = vunpack.c.l.s4 1983009808
    %v574 = vunpack.c.0.s8 %v573
    %v575 = vlaneseq
    %v576 = vshrl.u32 %v575, 7
    %v577 = vsub.s32 %v574, %v576
    %v578 = vrot.slane %v564, %v577
    %v579 = vcombine.high %v571, %v571
    %580 = vrot.lane.b32.xlu0 %v571, 96
    %v581 = vpop.permute.xlu0 %580
    %582 = vrot.lane.b32.xlu0 %v579, 96
    %v583 = vpop.permute.xlu0 %582
    %584 = vrot.lane.b32.xlu0 %v578, 96
    %v585 = vpop.permute.xlu0 %584
    %v586 = vsel %vm291, %v581, %v583
    %v587 = vsel %vm291, %v583, %v585
    %v590 = vsel %vm67, %v586, 0.0
    %v591 = vsel %vm68, %v587, 0.0
    %v594 = vrot.slane %v590, 4
    %v595 = vrot.slane %v591, 4
    %598 = vst [vmem:[#allocation2 + $0x30] sm:$0x30] %v594
    %599 = vst [vmem:[#allocation2 + $0x38] sm:$0x30] %v595
    %v600 = vld [vmem:[%s371] sm:$0x3f]
    %v602 = vcombine.low %v600, %v600
    %v604 = vunpack.c.l.s4 1983009808
    %v605 = vunpack.c.0.s8 %v604
    %v606 = vlaneseq
    %v607 = vshrl.u32 %v606, 7
    %v608 = vsub.s32 %v605, %v607
    %v609 = vrot.slane %v602, %v608
    %v611 = vunpack.c.l.s4 1983009808
    %v612 = vunpack.c.0.s8 %v611
    %v613 = vlaneseq
    %v614 = vshrl.u32 %v613, 7
    %v615 = vsub.s32 %v612, %v614
    %v616 = vrot.slane %v600, %v615
    %v617 = vcombine.low %v609, %v609
    %v618 = vcombine.low %v616, %v616
    %619 = vrot.lane.b32.xlu0 %v617, 95
    %v620 = vpop.permute.xlu0 %619
    %621 = vrot.lane.b32.xlu0 %v609, 95
    %v622 = vpop.permute.xlu0 %621
    %623 = vrot.lane.b32.xlu0 %v618, 95
    %v624 = vpop.permute.xlu0 %623
    %v625 = vsel %vm331, %v620, %v622
    %v626 = vsel %vm331, %v622, %v624
    %629 = vst [vmem:[#allocation2 + $0x30] sm:$0xc0] %v625
    %630 = vst [vmem:[#allocation2 + $0x38] sm:$0xc0] %v626
    %v631 = vld [vmem:[%s371] sm:$0x3f]
    %v633 = vcombine.high %v631, %v631
    %v635 = vunpack.c.l.s4 1983009808
    %v636 = vunpack.c.0.s8 %v635
    %v637 = vlaneseq
    %v638 = vshrl.u32 %v637, 7
    %v639 = vsub.s32 %v636, %v638
    %v640 = vrot.slane %v631, %v639
    %v642 = vunpack.c.l.s4 1983009808
    %v643 = vunpack.c.0.s8 %v642
    %v644 = vlaneseq
    %v645 = vshrl.u32 %v644, 7
    %v646 = vsub.s32 %v643, %v645
    %v647 = vrot.slane %v633, %v646
    %v648 = vcombine.high %v640, %v640
    %649 = vrot.lane.b32.xlu0 %v640, 94
    %v650 = vpop.permute.xlu0 %649
    %651 = vrot.lane.b32.xlu0 %v648, 94
    %v652 = vpop.permute.xlu0 %651
    %653 = vrot.lane.b32.xlu0 %v647, 94
    %v654 = vpop.permute.xlu0 %653
    %v655 = vsel %vm362, %v650, %v652
    %v656 = vsel %vm362, %v652, %v654
    %v659 = vsel %vm118, %v655, 0.0
    %v660 = vsel %vm119, %v656, 0.0
    %661 = vst [vmem:[#allocation2 + $0x50] sm:$0x3] %v659
    %662 = vst [vmem:[#allocation2 + $0x58] sm:$0x3] %v660
    %v663 = vld [vmem:[%s1] sm:$0x3]
    %v664 = vld [vmem:[#allocation2] sm:$0xff]
    %v665 = vld [vmem:[#allocation2 + $0x8] sm:$0xff]
    %v666 = vld [vmem:[#allocation2 + $0x10] sm:$0xff]
    %v667 = vld [vmem:[#allocation2 + $0x18] sm:$0xff]
    %v668 = vld [vmem:[#allocation2 + $0x20] sm:$0xff]
    %v669 = vld [vmem:[#allocation2 + $0x28] sm:$0xff]
    %v670 = vld [vmem:[#allocation2 + $0x30] sm:$0xff]
    %v671 = vld [vmem:[#allocation2 + $0x38] sm:$0xff]
    %v672 = vld [vmem:[#allocation2 + $0x40] sm:$0x7]
    %v673 = vld [vmem:[#allocation2 + $0x48] sm:$0x7]
    %v674 = vld [vmem:[#allocation2 + $0x50] sm:$0x7]
    %v675 = vld [vmem:[#allocation2 + $0x58] sm:$0x7]
    %vm676 = vcmask 154624
    %v678 = vsel %vm676, %v663, 0
    %vm680 = vcmask 1042432
    %v682 = vsel %vm680, %v672, 0
    %v685 = vsel %vm680, %v673, 0
    %v688 = vsel %vm680, %v674, 0
    %v691 = vsel %vm680, %v675, 0
    %693 = vmatprep.subr.mxu0 %v665
    %694 = vmatpush1.msra.mxu0 %v664
    %695 = vmatprep.subr.mxu0 %v669
    %696 = vmatpush1.msra.mxu0 %v668
    %697 = vmatprep.subr.mxu0 %v685
    %698 = vmatpush1.msra.mxu0 %v682
    %699 = vmatprep.subr.mxu0 0.0
    %700 = vmatpush1.msra.mxu0 0.0
    %701 = vmatprep.subr.mxu0 0.0
    %702 = vmatpush1.msra.mxu0 0.0
    %703 = vmatprep.subr.mxu0 0.0
    %704 = vmatpush1.msra.mxu0 0.0
    %705 = vmatprep.subr.mxu0 0.0
    %706 = vmatpush1.msra.mxu0 0.0
    %707 = vmatprep.subr.mxu0 0.0
    %708 = vmatpush1.msra.mxu0 0.0
    %709 = vmatprep.subr.mxu0 0.0
    %710 = vmatpush1.msra.mxu0 0.0
    %711 = vmatprep.subr.mxu0 0.0
    %712 = vmatpush1.msra.mxu0 0.0
    %713 = vmatprep.subr.mxu0 0.0
    %714 = vmatpush1.msra.mxu0 0.0
    %715 = vmatprep.subr.mxu0 0.0
    %716 = vmatpush1.msra.mxu0 0.0
    %717 = vmatprep.subr.mxu0 0.0
    %718 = vmatpush1.msra.mxu0 0.0
    %719 = vmatprep.subr.mxu0 0.0
    %720 = vmatpush1.msra.mxu0 0.0
    %721 = vmatprep.subr.mxu0 0.0
    %722 = vmatpush1.msra.mxu0 0.0
    %723 = vmatprep.subr.mxu0 0.0
    %724 = vmatpush1.msra.mxu0 0.0
    %725 = vmatprep.subr.mxu0 0.0
    %726 = vmatpush1.msra.mxu0 0.0
    %727 = vmatprep.subr.mxu0 0.0
    %728 = vmatpush1.msra.mxu0 0.0
    %729 = vmatprep.subr.mxu0 0.0
    %730 = vmatpush1.msra.mxu0 0.0
    %731 = vmatprep.subr.mxu0 0.0
    %732 = vmatpush1.msra.mxu0 0.0
    %733 = vmatprep.subr.mxu0 0.0
    %734 = vmatpush1.msra.mxu0 0.0
    %735 = vmatprep.subr.mxu0 0.0
    %736 = vmatpush1.msra.mxu0 0.0
    %737 = vmatprep.subr.mxu0 0.0
    %738 = vmatpush1.msra.mxu0 0.0
    %739 = vmatprep.subr.mxu0 0.0
    %740 = vmatpush1.msra.mxu0 0.0
    %741 = vmatprep.subr.mxu0 0.0
    %742 = vmatpush1.msra.mxu0 0.0
    %743 = vmatprep.subr.mxu0 0.0
    %744 = vmatpush1.msra.mxu0 0.0
    %745 = vmatprep.subr.mxu0 0.0
    %746 = vmatpush1.msra.mxu0 0.0
    %747 = vmatprep.subr.mxu0 0.0
    %748 = vmatpush1.msra.mxu0 0.0
    %749 = vmatprep.subr.mxu0 0.0
    %750 = vmatpush1.msra.mxu0 0.0
    %751 = vmatprep.subr.mxu0 0.0
    %752 = vmatpush1.msra.mxu0 0.0
    %753 = vmatprep.subr.mxu0 0.0
    %754 = vmatpush1.msra.mxu0 0.0
    %755 = vmatprep.subr.mxu0 0.0
    %756 = vmatpush1.msra.mxu0 0.0
    %757 = vmatprep.mubr.f32.mxu0 0.0
    %758 = vmatmul.mubr.f32.gmra.mrb[0].mxu0 %v678
    %v759 = vpop.f32.mrb[0].mxu0
    %v760 = vadd.f32 0.0, %v759
    %v761 = vpop.f32.mrb[0].mxu0
    %v762 = vadd.f32 0.0, %v761
    %763 = vdwg.mxu0
    %764 = vmatprep.subr.mxu0 %v667
    %765 = vmatpush1.msra.mxu0 %v666
    %766 = vmatprep.subr.mxu0 %v671
    %767 = vmatpush1.msra.mxu0 %v670
    %768 = vmatprep.subr.mxu0 %v691
    %769 = vmatpush1.msra.mxu0 %v688
    %770 = vmatprep.subr.mxu0 0.0
    %771 = vmatpush1.msra.mxu0 0.0
    %772 = vmatprep.subr.mxu0 0.0
    %773 = vmatpush1.msra.mxu0 0.0
    %774 = vmatprep.subr.mxu0 0.0
    %775 = vmatpush1.msra.mxu0 0.0
    %776 = vmatprep.subr.mxu0 0.0
    %777 = vmatpush1.msra.mxu0 0.0
    %778 = vmatprep.subr.mxu0 0.0
    %779 = vmatpush1.msra.mxu0 0.0
    %780 = vmatprep.subr.mxu0 0.0
    %781 = vmatpush1.msra.mxu0 0.0
    %782 = vmatprep.subr.mxu0 0.0
    %783 = vmatpush1.msra.mxu0 0.0
    %784 = vmatprep.subr.mxu0 0.0
    %785 = vmatpush1.msra.mxu0 0.0
    %786 = vmatprep.subr.mxu0 0.0
    %787 = vmatpush1.msra.mxu0 0.0
    %788 = vmatprep.subr.mxu0 0.0
    %789 = vmatpush1.msra.mxu0 0.0
    %790 = vmatprep.subr.mxu0 0.0
    %791 = vmatpush1.msra.mxu0 0.0
    %792 = vmatprep.subr.mxu0 0.0
    %793 = vmatpush1.msra.mxu0 0.0
    %794 = vmatprep.subr.mxu0 0.0
    %795 = vmatpush1.msra.mxu0 0.0
    %796 = vmatprep.subr.mxu0 0.0
    %797 = vmatpush1.msra.mxu0 0.0
    %798 = vmatprep.subr.mxu0 0.0
    %799 = vmatpush1.msra.mxu0 0.0
    %800 = vmatprep.subr.mxu0 0.0
    %801 = vmatpush1.msra.mxu0 0.0
    %802 = vmatprep.subr.mxu0 0.0
    %803 = vmatpush1.msra.mxu0 0.0
    %804 = vmatprep.subr.mxu0 0.0
    %805 = vmatpush1.msra.mxu0 0.0
    %806 = vmatprep.subr.mxu0 0.0
    %807 = vmatpush1.msra.mxu0 0.0
    %808 = vmatprep.subr.mxu0 0.0
    %809 = vmatpush1.msra.mxu0 0.0
    %810 = vmatprep.subr.mxu0 0.0
    %811 = vmatpush1.msra.mxu0 0.0
    %812 = vmatprep.subr.mxu0 0.0
    %813 = vmatpush1.msra.mxu0 0.0
    %814 = vmatprep.subr.mxu0 0.0
    %815 = vmatpush1.msra.mxu0 0.0
    %816 = vmatprep.subr.mxu0 0.0
    %817 = vmatpush1.msra.mxu0 0.0
    %818 = vmatprep.subr.mxu0 0.0
    %819 = vmatpush1.msra.mxu0 0.0
    %820 = vmatprep.subr.mxu0 0.0
    %821 = vmatpush1.msra.mxu0 0.0
    %822 = vmatprep.subr.mxu0 0.0
    %823 = vmatpush1.msra.mxu0 0.0
    %824 = vmatprep.subr.mxu0 0.0
    %825 = vmatpush1.msra.mxu0 0.0
    %826 = vmatprep.subr.mxu0 0.0
    %827 = vmatpush1.msra.mxu0 0.0
    %828 = vmatprep.mubr.f32.mxu0 0.0
    %829 = vmatmul.mubr.f32.gmra.mrb[0].mxu0 %v678
    %v830 = vpop.f32.mrb[0].mxu0
    %v831 = vadd.f32 0.0, %v830
    %v832 = vpop.f32.mrb[0].mxu0
    %v833 = vadd.f32 0.0, %v832
    %834 = vdwg.mxu0
    %v837 = vcombine.low %v760, %v762
    %v839 = vunpack.c.l.s4 1983009808
    %v840 = vunpack.c.0.s8 %v839
    %v841 = vlaneseq
    %v842 = vshrl.u32 %v841, 7
    %v843 = vsub.s32 %v840, %v842
    %v844 = vrot.slane %v837, %v843
    %846 = vst [vmem:[#allocation6] sm:$0xf] %v844
    %v849 = vcombine.low %v831, %v833
    %v851 = vunpack.c.l.s4 1983009808
    %v852 = vunpack.c.0.s8 %v851
    %v853 = vlaneseq
    %v854 = vshrl.u32 %v853, 7
    %v855 = vsub.s32 %v852, %v854
    %v856 = vrot.slane %v849, %v855
    %s858 = scalar_lea.vmem [#allocation6], 4
    %859 = vst [vmem:[%s858] sm:$0xf] %v856
    // Predicated region
    $region14: #{tpu_custom_call.1} parent=1 // pred_check
      _
    $region15: #{tpu_custom_call.1} parent=1 // pred_check_branch
      %861 = sbr.rel (0) target = $region17
    $region16: #{tpu_custom_call.1} parent=1 // pred_region
      %s863 = ssub.s32 128, 128
      %864 = vsyncadd [#allocation5], %s863
      %s865 = sshll.u32 [#allocation6], 4
      %s866 = int_to_ptr.vmem [resolvable:$true] %s865
      %871 = dma.vmem_to_hbm [thread:$0]  %s866, 128, %s2, [#allocation5], 64, 64, 4
    $region17: #{tpu_custom_call.1} parent=1 // pred_fallthru
      _
    // Predicated region
    $region18: #{tpu_custom_call.1} parent=1 // pred_check
      _
    $region19: #{tpu_custom_call.1} parent=1 // pred_check_branch
      %873 = sbr.rel (0) target = $region21
    $region20: #{tpu_custom_call.1} parent=1 // pred_region
      %874 = dma.done [#allocation5], 128
    $region21: #{tpu_custom_call.1} parent=1 // pred_fallthru
      _
    %875 = vsyncpa [#allocation4], 1
    %876 = vsyncpa [#allocation5], 1

</llo_original>
